<compile_context>
chip_gen: v5e
topology: v5e:2x2
jax: 0.10.0
libtpu: 0.0.40
codegen_flags: <defaults>
</compile_context>

<pallas_src>
import jax
import jax.numpy as jnp
from jax.experimental import pallas as pl
from jax.experimental.pallas import tpu as pltpu


_VMEM_BUDGET_BYTES = 24 << 20   # double-buffered scratch target (v7x-safe)
_VMEM_LIMIT_BYTES = 32 << 20    # scoped VMEM limit passed to Mosaic
_FALLBACK_BYTES = 256 << 10     # below this, skip the standalone pallas_call
_MIN_SPLIT_ROWS = 1024          # only split a single-tile batch if it's big


def _param_loss_kernel(out_ref, gt_ref, valid_ref, loss_ref):
    # Pure VPU elementwise hot path; valid_ref is (tb, 1) or (tb, D) and
    # broadcasts across the lane dimension for free.
    diff = out_ref[...] - gt_ref[...]
    loss_ref[...] = jnp.abs(diff) * valid_ref[...]


def _lane_pad(d):
    return ((d + 127) // 128) * 128


def param_loss(param_out, param_gt, valid, *, tile_b=4096, force_pallas=False):
    """Pallas implementation of ParamLoss.forward.

    param_out, param_gt: (B, D)
    valid:               (B,), (B, 1) or (B, D)  (PyTorch broadcasting semantics)
    returns:             (B, D), same dtype as param_out, NOT reduced.
    """
    assert param_out.shape == param_gt.shape
    B, D = param_out.shape

    valid = valid.astype(param_out.dtype)
    if valid.ndim == 1:
        valid = valid.reshape(B, 1)
    assert valid.shape[0] == B and valid.shape[1] in (1, D)
    Dv = valid.shape[1]

    itemsize = jnp.dtype(param_out.dtype).itemsize

    # Tiny inputs: launch + pipeline overhead dominates -> let XLA fuse it.
    if not force_pallas and B * D * itemsize < _FALLBACK_BYTES:
        return jnp.abs(param_out - param_gt) * valid

    # Sublane packing multiple: 8 rows/tile for 4-byte, 16 for bf16, 32 for 1-byte.
    pack = {4: 8, 2: 16, 1: 32}.get(itemsize, 8)

    # VMEM budget per row (double-buffered; every block pads its last dim to a
    # multiple of 128 lanes, so D=72 costs 128 lanes in VMEM).
    bytes_per_row = 2 * (3 * _lane_pad(D) + _lane_pad(Dv)) * itemsize
    vmem_cap_rows = max(pack, _VMEM_BUDGET_BYTES // bytes_per_row)
    tile_cap = max(pack, min(int(tile_b), int(vmem_cap_rows)))
    tile_cap = (tile_cap // pack) * pack if tile_cap >= pack else tile_cap

    if B <= tile_cap:
        # Whole batch fits in one tile.  If it is large, split into 2 row
        # blocks so v7x's 2 TensorCores both get a "parallel" grid step.
        if B >= 2 * _MIN_SPLIT_ROWS and B % (2 * pack) == 0:
            tb = B // 2
        else:
            # Single block: block dims equal the full array dims, so no
            # (8,128) divisibility constraint applies.
            tb = B
    else:
        # tb is a multiple of `pack`; last dim equals the full array dim.
        # Pallas masks the ragged final block if tb does not divide B.
        tb = tile_cap

    grid = (pl.cdiv(B, tb),)

    def row_spec(width):
        return pl.BlockSpec((tb, width), lambda i: (i, 0))

    cost = pl.CostEstimate(
        flops=3 * B * D,                                   # sub + abs + mul
        transcendentals=0,
        bytes_accessed=(2 * B * D + B * Dv + B * D) * itemsize,
    )

    return pl.pallas_call(
        _param_loss_kernel,
        out_shape=jax.ShapeDtypeStruct((B, D), param_out.dtype),
        grid=grid,
        in_specs=[row_spec(D), row_spec(D), row_spec(Dv)],
        out_specs=row_spec(D),
        compiler_params=pltpu.CompilerParams(
            dimension_semantics=("parallel",),
            vmem_limit_bytes=_VMEM_LIMIT_BYTES,
        ),
        cost_estimate=cost,
    )(param_out, param_gt, valid)


if __name__ == "__main__":
    D = 72  # e.g. 72 SMPL pose params

    # 1) Production-tiny shape: takes the XLA-fusion fast path.
    key = jax.random.PRNGKey(0)
    k1, k2, k3 = jax.random.split(key, 3)
    B0 = 8
    p_out0 = jax.random.normal(k1, (B0, D), dtype=jnp.float32)
    p_gt0 = jax.random.normal(k2, (B0, D), dtype=jnp.float32)
    valid0 = (jax.random.uniform(k3, (B0, 1)) > 0.3).astype(jnp.float32)
    loss0 = jax.block_until_ready(param_loss(p_out0, p_gt0, valid0))
    ref0 = jnp.abs(p_out0 - p_gt0) * valid0
    assert loss0.shape == (B0, D)
    assert jnp.allclose(loss0, ref0, atol=1e-6), "fast-path mismatch vs reference"

    # 2) Pallas path: multi-block grid with a ragged final block
    #    (B=300, tb=128 -> grid=(3,), last block masked to 44 rows).
    k4, k5, k6 = jax.random.split(jax.random.PRNGKey(0), 3)
    B1 = 300
    p_out1 = jax.random.normal(k4, (B1, D), dtype=jnp.float32)
    p_gt1 = jax.random.normal(k5, (B1, D), dtype=jnp.float32)
    valid1 = (jax.random.uniform(k6, (B1, 1)) > 0.3).astype(jnp.float32)
    loss1 = jax.block_until_ready(
        param_loss(p_out1, p_gt1, valid1, tile_b=128, force_pallas=True))
    ref1 = jnp.abs(p_out1 - p_gt1) * valid1
    assert loss1.shape == (B1, D)
    assert jnp.allclose(loss1, ref1, atol=1e-6), "pallas-path mismatch vs reference"

    print("KERNEL_OK")
</pallas_src>

<mosaic_0001>
module attributes {stable_mosaic.version = 11 : i64} {
  func.func @_param_loss_kernel(%arg0: i32, %arg1: memref<128x72xf32, #tpu.memory_space<vmem>>, %arg2: memref<128x72xf32, #tpu.memory_space<vmem>>, %arg3: memref<128x1xf32, #tpu.memory_space<vmem>>, %arg4: memref<128x72xf32, #tpu.memory_space<vmem>>) attributes {dimension_semantics = [#tpu.dimension_semantics<parallel>], iteration_bounds = array<i64: 3>, scalar_prefetch = 0 : i64, scratch_operands = 0 : i64, tpu.core_type = #tpu.core_type<tc>, window_params = [{transform_indices = @transform_0, window_bounds = array<i64: 128, 72>}, {transform_indices = @transform_1, window_bounds = array<i64: 128, 72>}, {transform_indices = @transform_2, window_bounds = array<i64: 128, 1>}, {transform_indices = @transform_3, window_bounds = array<i64: 128, 72>}]} {
    %c0 = arith.constant 0 : index
    %c0_0 = arith.constant 0 : index
    %0 = vector.load %arg1[%c0, %c0_0] : memref<128x72xf32, #tpu.memory_space<vmem>>, vector<128x72xf32>
    %c0_1 = arith.constant 0 : index
    %c0_2 = arith.constant 0 : index
    %1 = vector.load %arg2[%c0_1, %c0_2] : memref<128x72xf32, #tpu.memory_space<vmem>>, vector<128x72xf32>
    %2 = arith.subf %0, %1 : vector<128x72xf32>
    %3 = math.absf %2 : vector<128x72xf32>
    %c0_3 = arith.constant 0 : index
    %c0_4 = arith.constant 0 : index
    %4 = vector.load %arg3[%c0_3, %c0_4] : memref<128x1xf32, #tpu.memory_space<vmem>>, vector<128x1xf32>
    %5 = vector.broadcast %4 : vector<128x1xf32> to vector<128x72xf32>
    %6 = arith.mulf %3, %5 : vector<128x72xf32>
    %c0_5 = arith.constant 0 : index
    %c0_6 = arith.constant 0 : index
    %7 = vector.load %arg4[%c0_5, %c0_6] : memref<128x72xf32, #tpu.memory_space<vmem>>, vector<128x72xf32>
    tpu.vector_store %arg4[%c0_5, %c0_6], %6 {strides = array<i32>} : memref<128x72xf32, #tpu.memory_space<vmem>>, vector<128x72xf32>,
    return
  }
  func.func @transform_0(%arg0: i32) -> (i32, i32) {
    %c0_i32 = arith.constant 0 : i32
    %c0_i32_0 = arith.constant 0 : i32
    return %arg0, %c0_i32 : i32, i32
  }
  func.func @transform_1(%arg0: i32) -> (i32, i32) {
    %c0_i32 = arith.constant 0 : i32
    %c0_i32_0 = arith.constant 0 : i32
    return %arg0, %c0_i32 : i32, i32
  }
  func.func @transform_2(%arg0: i32) -> (i32, i32) {
    %c0_i32 = arith.constant 0 : i32
    %c0_i32_0 = arith.constant 0 : i32
    return %arg0, %c0_i32 : i32, i32
  }
  func.func @transform_3(%arg0: i32) -> (i32, i32) {
    %c0_i32 = arith.constant 0 : i32
    %c0_i32_0 = arith.constant 0 : i32
    return %arg0, %c0_i32 : i32, i32
  }
}

</mosaic_0001>

<llo_original>
// kernel: tpu_custom_call.1
$region0: #{tpu_custom_call.1}
  #allocation0 [shape = 'u32[]', space=smem, size = 0x4, offset = 0x4, fixed_abs, tag = 'smem constant byte address 0x4 - core index']
  #allocation1 [shape = 'u32[72,128]{1,0:T(1,128)}', space=vmem, size = 0x9000, scoped, tag = 'internal scratch']
  %s0 = inlined_call_operand.vmem [shape: f32[300,72], index: 0, kind: input, shape index: {}]
  %s1 = inlined_call_operand.vmem [shape: f32[300,72], index: 1, kind: input, shape index: {}]
  %s2 = inlined_call_operand.vmem [shape: f32[300,1], index: 2, kind: input, shape index: {}]
  %s3 = inlined_call_operand.vmem [shape: f32[300,72], index: 3, kind: output, shape index: {}]
  %s4 = sld [smem:[#allocation0]]
  $region93: #{tpu_custom_call.1} parent=0
    _
  %s6 = ssub.s32 1, %s4
  %s7 = scalar_select 0, %s6, %s4
  $region1: #{tpu_custom_call.1} parent=0
    #allocation2 [shape = 'u8[131072]{0}', space=vmem, size = 0x20000, scoped, tag = 'output window, operand 0']
    loop: start=0, step=1, limit=5
    $region2: #{tpu_custom_call.1} parent=1 // loop_pre_header
      _
    $region3: #{tpu_custom_call.1} parent=1 // loop_header
      %s9 = sphi 0, %s13
      %p10 = scmp.ge.s32.totalorder %s9, 5
      %s19 = sphi 0, %s21
      %s22 = sphi 0, %s19
      %s23 = sphi 0, %s22
      %s39 = sphi 0, %s23
      %s45 = sphi 0, %s47
      %s48 = sphi 0, %s45
      %s49 = sphi 0, %s48
      %s65 = sphi 0, %s49
      %s71 = sphi 0, %s73
      %s74 = sphi 0, %s71
      %s75 = sphi 0, %s74
      %s91 = sphi 0, %s75
      %s97 = sphi 0, %s99
      %s100 = sphi 0, %s97
      %s101 = sphi 0, %s100
      %s117 = sphi 0, %s101
    $region4: #{tpu_custom_call.1} parent=1 // loop_header_branch
      %12 = sbr.rel (%p10) target = $region8
    $region5: #{tpu_custom_call.1} parent=1 // loop_body
      %s14 = ssub.s32 %s9, 1
      %s15 = ssub.s32 %s9, 2
      %s16 = sadd.s32 %s9, 1
      %s17 = ssub.s32 %s9, %s16
      %p18 = scmp.eq.s32.totalorder %s17, 0
      %s20 = sadd.s32 %s19, 1
      %s21 = scalar_select %p18, %s19, %s20
      %p24 = pneg %p18
      %p25 = scmp.eq.s32.totalorder %s9, 2
      %p26 = por %p24, %p25
      %p27 = scmp.ne.s32.totalorder %s19, %s22
      %p28 = scmp.eq.s32.totalorder %s9, 0
      %p29 = por %p27, %p28
      %p30 = scmp.ne.s32.totalorder %s19, %s22
      %p31 = scmp.eq.s32.totalorder %s14, 2
      %p32 = por %p30, %p31
      %p33 = scmp.ne.s32.totalorder %s22, %s23
      %p34 = scmp.eq.s32.totalorder %s14, 0
      %p35 = por %p33, %p34
      %p36 = scmp.ne.s32.totalorder %s22, %s23
      %p37 = scmp.eq.s32.totalorder %s15, 2
      %p38 = por %p36, %p37
      %p40 = scmp.ne.s32.totalorder %s23, %s39
      %p41 = scmp.eq.s32.totalorder %s15, 0
      %p42 = por %p40, %p41
      %s43 = ssub.s32 %s9, %s16
      %p44 = scmp.eq.s32.totalorder %s43, 0
      %s46 = sadd.s32 %s45, 1
      %s47 = scalar_select %p44, %s45, %s46
      %p50 = pneg %p44
      %p51 = scmp.eq.s32.totalorder %s9, 2
      %p52 = por %p50, %p51
      %p53 = scmp.ne.s32.totalorder %s45, %s48
      %p54 = scmp.eq.s32.totalorder %s9, 0
      %p55 = por %p53, %p54
      %p56 = scmp.ne.s32.totalorder %s45, %s48
      %p57 = scmp.eq.s32.totalorder %s14, 2
      %p58 = por %p56, %p57
      %p59 = scmp.ne.s32.totalorder %s48, %s49
      %p60 = scmp.eq.s32.totalorder %s14, 0
      %p61 = por %p59, %p60
      %p62 = scmp.ne.s32.totalorder %s48, %s49
      %p63 = scmp.eq.s32.totalorder %s15, 2
      %p64 = por %p62, %p63
      %p66 = scmp.ne.s32.totalorder %s49, %s65
      %p67 = scmp.eq.s32.totalorder %s15, 0
      %p68 = por %p66, %p67
      %s69 = ssub.s32 %s9, %s16
      %p70 = scmp.eq.s32.totalorder %s69, 0
      %s72 = sadd.s32 %s71, 1
      %s73 = scalar_select %p70, %s71, %s72
      %p76 = pneg %p70
      %p77 = scmp.eq.s32.totalorder %s9, 2
      %p78 = por %p76, %p77
      %p79 = scmp.ne.s32.totalorder %s71, %s74
      %p80 = scmp.eq.s32.totalorder %s9, 0
      %p81 = por %p79, %p80
      %p82 = scmp.ne.s32.totalorder %s71, %s74
      %p83 = scmp.eq.s32.totalorder %s14, 2
      %p84 = por %p82, %p83
      %p85 = scmp.ne.s32.totalorder %s74, %s75
      %p86 = scmp.eq.s32.totalorder %s14, 0
      %p87 = por %p85, %p86
      %p88 = scmp.ne.s32.totalorder %s74, %s75
      %p89 = scmp.eq.s32.totalorder %s15, 2
      %p90 = por %p88, %p89
      %p92 = scmp.ne.s32.totalorder %s75, %s91
      %p93 = scmp.eq.s32.totalorder %s15, 0
      %p94 = por %p92, %p93
      %s95 = ssub.s32 %s9, %s16
      %p96 = scmp.eq.s32.totalorder %s95, 0
      %s98 = sadd.s32 %s97, 1
      %s99 = scalar_select %p96, %s97, %s98
      %p102 = pneg %p96
      %p103 = scmp.eq.s32.totalorder %s9, 2
      %p104 = por %p102, %p103
      %p105 = scmp.ne.s32.totalorder %s97, %s100
      %p106 = scmp.eq.s32.totalorder %s9, 0
      %p107 = por %p105, %p106
      %p108 = scmp.ne.s32.totalorder %s97, %s100
      %p109 = scmp.eq.s32.totalorder %s14, 2
      %p110 = por %p108, %p109
      %p111 = scmp.ne.s32.totalorder %s100, %s101
      %p112 = scmp.eq.s32.totalorder %s14, 0
      %p113 = por %p111, %p112
      %p114 = scmp.ne.s32.totalorder %s100, %s101
      %p115 = scmp.eq.s32.totalorder %s15, 2
      %p116 = por %p114, %p115
      %p118 = scmp.ne.s32.totalorder %s101, %s117
      %p119 = scmp.eq.s32.totalorder %s15, 0
      %p120 = por %p118, %p119
      %p121 = scmp.le.s32.totalorder 1, %s9
      %p122 = scmp.lt.s32.totalorder %s9, 4
      %p123 = pnand %p121, %p122
      %p124 = pneg %p123
      // Predicated region
      $region9: #{tpu_custom_call.1} parent=5 // pred_check
        _
      $region10: #{tpu_custom_call.1} parent=5 // pred_check_branch
        %126 = sbr.rel (%p123) target = $region12
      $region11: #{tpu_custom_call.1} parent=5 // pred_region
        %s127 = ssub.s32 %s9, 1
      $region12: #{tpu_custom_call.1} parent=5 // pred_fallthru
        _
      %p128 = scmp.lt.s32.totalorder %s9, 3
      // Predicated region
      $region13: #{tpu_custom_call.1} parent=5 // pred_check
        %p129 = pneg %p128
      $region14: #{tpu_custom_call.1} parent=5 // pred_check_branch
        %131 = sbr.rel (%p129) target = $region16
      $region15: #{tpu_custom_call.1} parent=5 // pred_region
        // Predicated region
        $region17: #{tpu_custom_call.1} parent=15 // pred_check
          %p132 = pneg %p29
        $region18: #{tpu_custom_call.1} parent=15 // pred_check_branch
          %134 = sbr.rel (%p132) target = $region20
        $region19: #{tpu_custom_call.1} parent=15 // pred_region
          %s135 = smul.u32 16, %s9
          %s136 = ssub.s32 38, %s135
          %p137 = scmp.lt.s32.totalorder %s136, 16
          %s138 = scalar_select %p137, %s136, 16
          %s139 = smul.u32 8, %s138
          %p140 = scmp.lt.s32.totalorder %s135, 37
          %s141 = scalar_select %p140, %s135, 37
          %s142 = smul.addr %s141, 8
          %s143 = scalar_lea.vmem %s0, %s142
          %s144 = smul.u32 16, %s9
          %s145 = ssub.s32 38, %s144
          %p146 = scmp.lt.s32.totalorder %s145, 16
          %s147 = scalar_select %p146, %s145, 16
          %s148 = smul.u32 8, %s147
        $region20: #{tpu_custom_call.1} parent=15 // pred_fallthru
          _
        // Predicated region
        $region21: #{tpu_custom_call.1} parent=15 // pred_check
          %p149 = pneg %p55
        $region22: #{tpu_custom_call.1} parent=15 // pred_check_branch
          %151 = sbr.rel (%p149) target = $region24
        $region23: #{tpu_custom_call.1} parent=15 // pred_region
          %s152 = smul.u32 16, %s9
          %s153 = ssub.s32 38, %s152
          %p154 = scmp.lt.s32.totalorder %s153, 16
          %s155 = scalar_select %p154, %s153, 16
          %s156 = smul.u32 8, %s155
          %p157 = scmp.lt.s32.totalorder %s152, 37
          %s158 = scalar_select %p157, %s152, 37
          %s159 = smul.addr %s158, 8
          %s160 = scalar_lea.vmem %s1, %s159
          %s161 = smul.u32 16, %s9
          %s162 = ssub.s32 38, %s161
          %p163 = scmp.lt.s32.totalorder %s162, 16
          %s164 = scalar_select %p163, %s162, 16
          %s165 = smul.u32 8, %s164
        $region24: #{tpu_custom_call.1} parent=15 // pred_fallthru
          _
        // Predicated region
        $region25: #{tpu_custom_call.1} parent=15 // pred_check
          %p166 = pneg %p81
        $region26: #{tpu_custom_call.1} parent=15 // pred_check_branch
          %168 = sbr.rel (%p166) target = $region28
        $region27: #{tpu_custom_call.1} parent=15 // pred_region
          %s169 = smul.u32 16, %s9
          %s170 = ssub.s32 38, %s169
          %p171 = scmp.lt.s32.totalorder %s170, 16
          %s172 = scalar_select %p171, %s170, 16
          %s173 = smul.u32 8, %s172
          %p174 = scmp.lt.s32.totalorder %s169, 37
          %s175 = scalar_select %p174, %s169, 37
          %s176 = smul.addr %s175, 8
          %s177 = scalar_lea.vmem %s2, %s176
          %s178 = smul.u32 16, %s9
          %s179 = ssub.s32 38, %s178
          %p180 = scmp.lt.s32.totalorder %s179, 16
          %s181 = scalar_select %p180, %s179, 16
          %s182 = smul.u32 8, %s181
        $region28: #{tpu_custom_call.1} parent=15 // pred_fallthru
          _
      $region16: #{tpu_custom_call.1} parent=5 // pred_fallthru
        _
      %p183 = scmp.le.s32.totalorder 1, %s9
      %p184 = scmp.lt.s32.totalorder %s9, 4
      %p185 = pnand %p183, %p184
      %p186 = pneg %p185
      // Predicated region
      $region29: #{tpu_custom_call.1} parent=5 // pred_check
        _
      $region30: #{tpu_custom_call.1} parent=5 // pred_check_branch
        %188 = sbr.rel (%p185) target = $region32
      $region31: #{tpu_custom_call.1} parent=5 // pred_region
        %s189 = ssub.s32 %s9, 1
        %s190 = smul.u32 16, %s14
        %s191 = ssub.s32 38, %s190
        %p192 = scmp.lt.s32.totalorder %s191, 16
        %s193 = scalar_select %p192, %s191, 16
        %s194 = smul.u32 8, %s193
        %p195 = scmp.lt.s32.totalorder %s190, 37
        %s196 = scalar_select %p195, %s190, 37
        %s197 = smul.addr %s196, 8
        %s198 = scalar_lea.vmem %s0, %s197
        %p199 = pneg %p35
        %p200 = pneg %p32
        %s201 = smul.u32 16, %s14
        %s202 = ssub.s32 38, %s201
        %p203 = scmp.lt.s32.totalorder %s202, 16
        %s204 = scalar_select %p203, %s202, 16
        %s205 = smul.u32 8, %s204
        %p206 = scmp.lt.s32.totalorder %s201, 37
        %s207 = scalar_select %p206, %s201, 37
        %s208 = smul.addr %s207, 8
        %s209 = scalar_lea.vmem %s1, %s208
        %p210 = pneg %p61
        %p211 = pneg %p58
        %s212 = smul.u32 16, %s14
        %s213 = ssub.s32 38, %s212
        %p214 = scmp.lt.s32.totalorder %s213, 16
        %s215 = scalar_select %p214, %s213, 16
        %s216 = smul.u32 8, %s215
        %p217 = scmp.lt.s32.totalorder %s212, 37
        %s218 = scalar_select %p217, %s212, 37
        %s219 = smul.addr %s218, 8
        %s220 = scalar_lea.vmem %s2, %s219
        %p221 = pneg %p87
        %p222 = pneg %p84
        %p223 = pneg %p113
        %p224 = pneg %p110
        %s225 = sand.u32 %s100, 1
        %s226 = sand.u32 %s100, 1
        %s227 = smul.addr %s226, 128
        %s228 = scalar_lea.vmem [#allocation2], %s227
        %s229 = smul.u32 16, %s14
        %s230 = ssub.s32 38, %s229
        %p231 = scmp.lt.s32.totalorder %s230, 16
        %s232 = scalar_select %p231, %s230, 16
        %s233 = smul.u32 8, %s232
        %p234 = scmp.lt.s32.totalorder %s229, 37
        %s235 = scalar_select %p234, %s229, 37
        %s236 = smul.addr %s235, 8
        %s237 = scalar_lea.vmem %s0, %s236
        %s238 = smul.u32 16, %s14
        %s239 = ssub.s32 38, %s238
        %p240 = scmp.lt.s32.totalorder %s239, 16
        %s241 = scalar_select %p240, %s239, 16
        %s242 = smul.u32 8, %s241
        %s243 = smul.u32 16, %s14
        %s244 = ssub.s32 38, %s243
        %p245 = scmp.lt.s32.totalorder %s244, 16
        %s246 = scalar_select %p245, %s244, 16
        %s247 = smul.u32 8, %s246
        %p248 = scmp.lt.s32.totalorder %s243, 37
        %s249 = scalar_select %p248, %s243, 37
        %s250 = smul.addr %s249, 8
        %s251 = scalar_lea.vmem %s1, %s250
        %s252 = smul.u32 16, %s14
        %s253 = ssub.s32 38, %s252
        %p254 = scmp.lt.s32.totalorder %s253, 16
        %s255 = scalar_select %p254, %s253, 16
        %s256 = smul.u32 8, %s255
        %s257 = smul.u32 16, %s14
        %s258 = ssub.s32 38, %s257
        %p259 = scmp.lt.s32.totalorder %s258, 16
        %s260 = scalar_select %p259, %s258, 16
        %s261 = smul.u32 8, %s260
        %p262 = scmp.lt.s32.totalorder %s257, 37
        %s263 = scalar_select %p262, %s257, 37
        %s264 = smul.addr %s263, 8
        %s265 = scalar_lea.vmem %s2, %s264
        %s266 = smul.u32 16, %s14
        %s267 = ssub.s32 38, %s266
        %p268 = scmp.lt.s32.totalorder %s267, 16
        %s269 = scalar_select %p268, %s267, 16
        %s270 = smul.u32 8, %s269
        %s271 = smul.u32 16, %s14
        %s272 = ssub.s32 38, %s271
        %p273 = scmp.lt.s32.totalorder %s272, 16
        %s274 = scalar_select %p273, %s272, 16
        %s275 = smul.u32 8, %s274
        %v276 = vld [vmem:[%s237] sm:$0xff]
        %v277 = vld [vmem:[%s237 + $0x8] sm:$0xff]
        %v278 = vld [vmem:[%s237 + $0x10] sm:$0xff]
        %v279 = vld [vmem:[%s237 + $0x18] sm:$0xff]
        %v280 = vld [vmem:[%s237 + $0x20] sm:$0xff]
        %v281 = vld [vmem:[%s237 + $0x28] sm:$0xff]
        %v282 = vld [vmem:[%s237 + $0x30] sm:$0xff]
        %v283 = vld [vmem:[%s237 + $0x38] sm:$0xff]
        %v284 = vld [vmem:[%s237 + $0x40] sm:$0xff]
        %v285 = vld [vmem:[%s237 + $0x48] sm:$0xff]
        %v286 = vld [vmem:[%s237 + $0x50] sm:$0xff]
        %v287 = vld [vmem:[%s237 + $0x58] sm:$0xff]
        %v288 = vld [vmem:[%s237 + $0x60] sm:$0xff]
        %v289 = vld [vmem:[%s237 + $0x68] sm:$0xff]
        %v290 = vld [vmem:[%s237 + $0x70] sm:$0xff]
        %v291 = vld [vmem:[%s237 + $0x78] sm:$0xff]
        %v292 = vld [vmem:[%s251] sm:$0xff]
        %v293 = vld [vmem:[%s251 + $0x8] sm:$0xff]
        %v294 = vld [vmem:[%s251 + $0x10] sm:$0xff]
        %v295 = vld [vmem:[%s251 + $0x18] sm:$0xff]
        %v296 = vld [vmem:[%s251 + $0x20] sm:$0xff]
        %v297 = vld [vmem:[%s251 + $0x28] sm:$0xff]
        %v298 = vld [vmem:[%s251 + $0x30] sm:$0xff]
        %v299 = vld [vmem:[%s251 + $0x38] sm:$0xff]
        %v300 = vld [vmem:[%s251 + $0x40] sm:$0xff]
        %v301 = vld [vmem:[%s251 + $0x48] sm:$0xff]
        %v302 = vld [vmem:[%s251 + $0x50] sm:$0xff]
        %v303 = vld [vmem:[%s251 + $0x58] sm:$0xff]
        %v304 = vld [vmem:[%s251 + $0x60] sm:$0xff]
        %v305 = vld [vmem:[%s251 + $0x68] sm:$0xff]
        %v306 = vld [vmem:[%s251 + $0x70] sm:$0xff]
        %v307 = vld [vmem:[%s251 + $0x78] sm:$0xff]
        %v308 = vsub.f32 %v276, %v292
        %v309 = vsub.f32 %v277, %v293
        %v310 = vsub.f32 %v278, %v294
        %v311 = vsub.f32 %v279, %v295
        %v312 = vsub.f32 %v280, %v296
        %v313 = vsub.f32 %v281, %v297
        %v314 = vsub.f32 %v282, %v298
        %v315 = vsub.f32 %v283, %v299
        %v316 = vsub.f32 %v284, %v300
        %v317 = vsub.f32 %v285, %v301
        %v318 = vsub.f32 %v286, %v302
        %v319 = vsub.f32 %v287, %v303
        %v320 = vsub.f32 %v288, %v304
        %v321 = vsub.f32 %v289, %v305
        %v322 = vsub.f32 %v290, %v306
        %v323 = vsub.f32 %v291, %v307
        %v324 = vand.u32 2147483647, %v308
        %v325 = vand.u32 2147483647, %v309
        %v326 = vand.u32 2147483647, %v310
        %v327 = vand.u32 2147483647, %v311
        %v328 = vand.u32 2147483647, %v312
        %v329 = vand.u32 2147483647, %v313
        %v330 = vand.u32 2147483647, %v314
        %v331 = vand.u32 2147483647, %v315
        %v332 = vand.u32 2147483647, %v316
        %v333 = vand.u32 2147483647, %v317
        %v334 = vand.u32 2147483647, %v318
        %v335 = vand.u32 2147483647, %v319
        %v336 = vand.u32 2147483647, %v320
        %v337 = vand.u32 2147483647, %v321
        %v338 = vand.u32 2147483647, %v322
        %v339 = vand.u32 2147483647, %v323
        %v340 = vld [vmem:[%s265] sm:$0xff]
        %v341 = vld [vmem:[%s265 + $0x8] sm:$0xff]
        %v342 = vld [vmem:[%s265 + $0x10] sm:$0xff]
        %v343 = vld [vmem:[%s265 + $0x18] sm:$0xff]
        %v344 = vld [vmem:[%s265 + $0x20] sm:$0xff]
        %v345 = vld [vmem:[%s265 + $0x28] sm:$0xff]
        %v346 = vld [vmem:[%s265 + $0x30] sm:$0xff]
        %v347 = vld [vmem:[%s265 + $0x38] sm:$0xff]
        %v348 = vld [vmem:[%s265 + $0x40] sm:$0xff]
        %v349 = vld [vmem:[%s265 + $0x48] sm:$0xff]
        %v350 = vld [vmem:[%s265 + $0x50] sm:$0xff]
        %v351 = vld [vmem:[%s265 + $0x58] sm:$0xff]
        %v352 = vld [vmem:[%s265 + $0x60] sm:$0xff]
        %v353 = vld [vmem:[%s265 + $0x68] sm:$0xff]
        %v354 = vld [vmem:[%s265 + $0x70] sm:$0xff]
        %v355 = vld [vmem:[%s265 + $0x78] sm:$0xff]
        %357 = vset.pattern.permute.xlu0 0
        %358 = vperm.xlu0 %357, %v340
        %v359 = vpop.permute.xlu0 %358
        %362 = vset.pattern.permute.xlu0 0
        %363 = vperm.xlu0 %362, %v341
        %v364 = vpop.permute.xlu0 %363
        %367 = vset.pattern.permute.xlu0 0
        %368 = vperm.xlu0 %367, %v342
        %v369 = vpop.permute.xlu0 %368
        %372 = vset.pattern.permute.xlu0 0
        %373 = vperm.xlu0 %372, %v343
        %v374 = vpop.permute.xlu0 %373
        %377 = vset.pattern.permute.xlu0 0
        %378 = vperm.xlu0 %377, %v344
        %v379 = vpop.permute.xlu0 %378
        %382 = vset.pattern.permute.xlu0 0
        %383 = vperm.xlu0 %382, %v345
        %v384 = vpop.permute.xlu0 %383
        %387 = vset.pattern.permute.xlu0 0
        %388 = vperm.xlu0 %387, %v346
        %v389 = vpop.permute.xlu0 %388
        %392 = vset.pattern.permute.xlu0 0
        %393 = vperm.xlu0 %392, %v347
        %v394 = vpop.permute.xlu0 %393
        %397 = vset.pattern.permute.xlu0 0
        %398 = vperm.xlu0 %397, %v348
        %v399 = vpop.permute.xlu0 %398
        %402 = vset.pattern.permute.xlu0 0
        %403 = vperm.xlu0 %402, %v349
        %v404 = vpop.permute.xlu0 %403
        %407 = vset.pattern.permute.xlu0 0
        %408 = vperm.xlu0 %407, %v350
        %v409 = vpop.permute.xlu0 %408
        %412 = vset.pattern.permute.xlu0 0
        %413 = vperm.xlu0 %412, %v351
        %v414 = vpop.permute.xlu0 %413
        %417 = vset.pattern.permute.xlu0 0
        %418 = vperm.xlu0 %417, %v352
        %v419 = vpop.permute.xlu0 %418
        %422 = vset.pattern.permute.xlu0 0
        %423 = vperm.xlu0 %422, %v353
        %v424 = vpop.permute.xlu0 %423
        %427 = vset.pattern.permute.xlu0 0
        %428 = vperm.xlu0 %427, %v354
        %v429 = vpop.permute.xlu0 %428
        %432 = vset.pattern.permute.xlu0 0
        %433 = vperm.xlu0 %432, %v355
        %v434 = vpop.permute.xlu0 %433
        %v436 = vmul.f32 %v324, %v359
        %v437 = vmul.f32 %v325, %v364
        %v438 = vmul.f32 %v326, %v369
        %v439 = vmul.f32 %v327, %v374
        %v440 = vmul.f32 %v328, %v379
        %v441 = vmul.f32 %v329, %v384
        %v442 = vmul.f32 %v330, %v389
        %v443 = vmul.f32 %v331, %v394
        %v444 = vmul.f32 %v332, %v399
        %v445 = vmul.f32 %v333, %v404
        %v446 = vmul.f32 %v334, %v409
        %v447 = vmul.f32 %v335, %v414
        %v448 = vmul.f32 %v336, %v419
        %v449 = vmul.f32 %v337, %v424
        %v450 = vmul.f32 %v338, %v429
        %v451 = vmul.f32 %v339, %v434
        %vm452 = vcmask 588800
        %453 = vst.msk [vmem:[%s228] sm:$0xff] %vm452, %v436
        %454 = vst.msk [vmem:[%s228 + $0x8] sm:$0xff] %vm452, %v437
        %455 = vst.msk [vmem:[%s228 + $0x10] sm:$0xff] %vm452, %v438
        %456 = vst.msk [vmem:[%s228 + $0x18] sm:$0xff] %vm452, %v439
        %457 = vst.msk [vmem:[%s228 + $0x20] sm:$0xff] %vm452, %v440
        %458 = vst.msk [vmem:[%s228 + $0x28] sm:$0xff] %vm452, %v441
        %459 = vst.msk [vmem:[%s228 + $0x30] sm:$0xff] %vm452, %v442
        %460 = vst.msk [vmem:[%s228 + $0x38] sm:$0xff] %vm452, %v443
        %461 = vst.msk [vmem:[%s228 + $0x40] sm:$0xff] %vm452, %v444
        %462 = vst.msk [vmem:[%s228 + $0x48] sm:$0xff] %vm452, %v445
        %463 = vst.msk [vmem:[%s228 + $0x50] sm:$0xff] %vm452, %v446
        %464 = vst.msk [vmem:[%s228 + $0x58] sm:$0xff] %vm452, %v447
        %465 = vst.msk [vmem:[%s228 + $0x60] sm:$0xff] %vm452, %v448
        %466 = vst.msk [vmem:[%s228 + $0x68] sm:$0xff] %vm452, %v449
        %467 = vst.msk [vmem:[%s228 + $0x70] sm:$0xff] %vm452, %v450
        %468 = vst.msk [vmem:[%s228 + $0x78] sm:$0xff] %vm452, %v451
        %s469 = sand.u32 %s100, 1
        %s470 = sand.u32 %s100, 1
        %s471 = smul.addr %s470, 128
        %s472 = scalar_lea.vmem [#allocation2], %s471
        // Predicated region
        $region33: #{tpu_custom_call.1} parent=31 // pred_check
          %p473 = pneg %p110
        $region34: #{tpu_custom_call.1} parent=31 // pred_check_branch
          %475 = sbr.rel (%p473) target = $region36
        $region35: #{tpu_custom_call.1} parent=31 // pred_region
          %s476 = smul.u32 16, %s14
          %s477 = ssub.s32 38, %s476
          %p478 = scmp.lt.s32.totalorder %s477, 16
          %s479 = scalar_select %p478, %s477, 16
          %s480 = smul.u32 8, %s479
          %p481 = scmp.ne.s32.totalorder 0, %s480
          %s482 = smul.addr %s476, 8
          %s483 = scalar_lea.vmem %s3, %s482
          // Predicated region
          $region37: #{tpu_custom_call.1} parent=35 // pred_check
            %p484 = pneg %p481
          $region38: #{tpu_custom_call.1} parent=35 // pred_check_branch
            %486 = sbr.rel (%p484) target = $region40
          $region39: #{tpu_custom_call.1} parent=35 // pred_region
            // Predicated region
            $region41: #{tpu_custom_call.1} parent=39 // pred_check
              _
            $region42: #{tpu_custom_call.1} parent=39 // pred_check_branch
              %488 = sbr.rel (0) target = $region44
            $region43: #{tpu_custom_call.1} parent=39 // pred_region
              // Predicated region
              $region63: #{tpu_custom_call.1} parent=43 // pred_check
                _
              $region64: #{tpu_custom_call.1} parent=43 // pred_check_branch
                %568 = sbr.rel (0) target = $region66
              $region65: #{tpu_custom_call.1} parent=43 // pred_region
                %s569 = sshrl.u32 %s479, 4
                // While loop
                $region67: #{tpu_custom_call.1} parent=65 // loop_pre_header
                  _
                $region68: #{tpu_custom_call.1} parent=65 // loop_header
                  %s571 = sphi 0, %s573
                  %p572 = scmp.ge.s32.totalorder %s571, %s569
                  %s576 = sphi 0, %s613
                  %s577 = sphi %s472, %s616
                  %s578 = sphi %s483, %s617
                $region69: #{tpu_custom_call.1} parent=65 // loop_header_branch
                  %575 = sbr.rel (%p572) target = $region73
                $region70: #{tpu_custom_call.1} parent=65 // loop_body
                  %v579 = vld [vmem:[%s577] sm:$0xff]
                  %580 = vst [vmem:[%s578] sm:$0xff] %v579
                  %v581 = vld [vmem:[%s577 + $0x8] sm:$0xff]
                  %582 = vst [vmem:[%s578 + $0x8] sm:$0xff] %v581
                  %v583 = vld [vmem:[%s577 + $0x10] sm:$0xff]
                  %584 = vst [vmem:[%s578 + $0x10] sm:$0xff] %v583
                  %v585 = vld [vmem:[%s577 + $0x18] sm:$0xff]
                  %586 = vst [vmem:[%s578 + $0x18] sm:$0xff] %v585
                  %v587 = vld [vmem:[%s577 + $0x20] sm:$0xff]
                  %588 = vst [vmem:[%s578 + $0x20] sm:$0xff] %v587
                  %v589 = vld [vmem:[%s577 + $0x28] sm:$0xff]
                  %590 = vst [vmem:[%s578 + $0x28] sm:$0xff] %v589
                  %v591 = vld [vmem:[%s577 + $0x30] sm:$0xff]
                  %592 = vst [vmem:[%s578 + $0x30] sm:$0xff] %v591
                  %v593 = vld [vmem:[%s577 + $0x38] sm:$0xff]
                  %594 = vst [vmem:[%s578 + $0x38] sm:$0xff] %v593
                  %v595 = vld [vmem:[%s577 + $0x40] sm:$0xff]
                  %596 = vst [vmem:[%s578 + $0x40] sm:$0xff] %v595
                  %v597 = vld [vmem:[%s577 + $0x48] sm:$0xff]
                  %598 = vst [vmem:[%s578 + $0x48] sm:$0xff] %v597
                  %v599 = vld [vmem:[%s577 + $0x50] sm:$0xff]
                  %600 = vst [vmem:[%s578 + $0x50] sm:$0xff] %v599
                  %v601 = vld [vmem:[%s577 + $0x58] sm:$0xff]
                  %602 = vst [vmem:[%s578 + $0x58] sm:$0xff] %v601
                  %v603 = vld [vmem:[%s577 + $0x60] sm:$0xff]
                  %604 = vst [vmem:[%s578 + $0x60] sm:$0xff] %v603
                  %v605 = vld [vmem:[%s577 + $0x68] sm:$0xff]
                  %606 = vst [vmem:[%s578 + $0x68] sm:$0xff] %v605
                  %v607 = vld [vmem:[%s577 + $0x70] sm:$0xff]
                  %608 = vst [vmem:[%s578 + $0x70] sm:$0xff] %v607
                  %v609 = vld [vmem:[%s577 + $0x78] sm:$0xff]
                  %610 = vst [vmem:[%s578 + $0x78] sm:$0xff] %v609
                  %s611 = sadd.s32 1, %s576
                  %p612 = scmp.ge.s32.totalorder %s611, %s569
                  %s613 = scalar_select %p612, 0, %s611
                  %s614 = smul.u32 %s613, 128
                  %s615 = smul.u32 %s613, 128
                  %s616 = scalar_lea.vmem %s472, %s614 [#allocation2]
                  %s617 = scalar_lea.vmem %s483, %s615
                $region71: #{tpu_custom_call.1} parent=65 // loop_footer
                  %s573 = sadd.s32 %s571, 1
                $region72: #{tpu_custom_call.1} parent=65 // loop_footer_branch
                  %570 = sbr.rel target = $region68
                $region73: #{tpu_custom_call.1} parent=65 // loop_exit
                  _
                %s618 = sshrl.u32 %s479, 4
                %s619 = sand.u32 %s479, 15
                %s620 = smul.u32 %s618, 16
                %s621 = smul.u32 8, %s620
                %s622 = scalar_lea.vmem %s472, %s621 [#allocation2]
                %s623 = smul.u32 8, %s620
                %s624 = scalar_lea.vmem %s483, %s623
                // While loop
                $region74: #{tpu_custom_call.1} parent=65 // loop_pre_header
                  _
                $region75: #{tpu_custom_call.1} parent=65 // loop_header
                  %s626 = sphi 0, %s628
                  %p627 = scmp.ge.s32.totalorder %s626, %s619
                  %s631 = sphi 0, %s638
                  %s632 = sphi %s622, %s641
                  %s633 = sphi %s624, %s642
                $region76: #{tpu_custom_call.1} parent=65 // loop_header_branch
                  %630 = sbr.rel (%p627) target = $region80
                $region77: #{tpu_custom_call.1} parent=65 // loop_body
                  %v634 = vld [vmem:[%s632] sm:$0xff]
                  %635 = vst [vmem:[%s633] sm:$0xff] %v634
                  %s636 = sadd.s32 1, %s631
                  %p637 = scmp.ge.s32.totalorder %s636, %s619
                  %s638 = scalar_select %p637, 0, %s636
                  %s639 = smul.u32 %s638, 8
                  %s640 = smul.u32 %s638, 8
                  %s641 = scalar_lea.vmem %s622, %s639 [#allocation2]
                  %s642 = scalar_lea.vmem %s624, %s640
                $region78: #{tpu_custom_call.1} parent=65 // loop_footer
                  %s628 = sadd.s32 %s626, 1
                $region79: #{tpu_custom_call.1} parent=65 // loop_footer_branch
                  %625 = sbr.rel target = $region75
                $region80: #{tpu_custom_call.1} parent=65 // loop_exit
                  _
              $region66: #{tpu_custom_call.1} parent=43 // pred_fallthru
                _
              // Predicated region
              $region81: #{tpu_custom_call.1} parent=43 // pred_check
                _
              $region82: #{tpu_custom_call.1} parent=43 // pred_check_branch
                %644 = sbr.rel target = $region84
              $region83: #{tpu_custom_call.1} parent=43 // pred_region
                _
              $region84: #{tpu_custom_call.1} parent=43 // pred_fallthru
                _
            $region44: #{tpu_custom_call.1} parent=39 // pred_fallthru
              _
            // Predicated region
            $region45: #{tpu_custom_call.1} parent=39 // pred_check
              _
            $region46: #{tpu_custom_call.1} parent=39 // pred_check_branch
              %490 = sbr.rel target = $region48
            $region47: #{tpu_custom_call.1} parent=39 // pred_region
              %s492 = ssub.s32 256, 1
              %s493 = sshrl.u32 %s479, 4
              // While loop
              $region49: #{tpu_custom_call.1} parent=47 // loop_pre_header
                _
              $region50: #{tpu_custom_call.1} parent=47 // loop_header
                %s495 = sphi 0, %s497
                %p496 = scmp.ge.s32.totalorder %s495, %s493
                %s500 = sphi 0, %s537
                %s501 = sphi %s472, %s540
                %s502 = sphi %s483, %s541
              $region51: #{tpu_custom_call.1} parent=47 // loop_header_branch
                %499 = sbr.rel (%p496) target = $region55
              $region52: #{tpu_custom_call.1} parent=47 // loop_body
                %v503 = vld [vmem:[%s501] sm:%s492]
                %504 = vst [vmem:[%s502] sm:%s492] %v503
                %v505 = vld [vmem:[%s501 + $0x8] sm:%s492]
                %506 = vst [vmem:[%s502 + $0x8] sm:%s492] %v505
                %v507 = vld [vmem:[%s501 + $0x10] sm:%s492]
                %508 = vst [vmem:[%s502 + $0x10] sm:%s492] %v507
                %v509 = vld [vmem:[%s501 + $0x18] sm:%s492]
                %510 = vst [vmem:[%s502 + $0x18] sm:%s492] %v509
                %v511 = vld [vmem:[%s501 + $0x20] sm:%s492]
                %512 = vst [vmem:[%s502 + $0x20] sm:%s492] %v511
                %v513 = vld [vmem:[%s501 + $0x28] sm:%s492]
                %514 = vst [vmem:[%s502 + $0x28] sm:%s492] %v513
                %v515 = vld [vmem:[%s501 + $0x30] sm:%s492]
                %516 = vst [vmem:[%s502 + $0x30] sm:%s492] %v515
                %v517 = vld [vmem:[%s501 + $0x38] sm:%s492]
                %518 = vst [vmem:[%s502 + $0x38] sm:%s492] %v517
                %v519 = vld [vmem:[%s501 + $0x40] sm:%s492]
                %520 = vst [vmem:[%s502 + $0x40] sm:%s492] %v519
                %v521 = vld [vmem:[%s501 + $0x48] sm:%s492]
                %522 = vst [vmem:[%s502 + $0x48] sm:%s492] %v521
                %v523 = vld [vmem:[%s501 + $0x50] sm:%s492]
                %524 = vst [vmem:[%s502 + $0x50] sm:%s492] %v523
                %v525 = vld [vmem:[%s501 + $0x58] sm:%s492]
                %526 = vst [vmem:[%s502 + $0x58] sm:%s492] %v525
                %v527 = vld [vmem:[%s501 + $0x60] sm:%s492]
                %528 = vst [vmem:[%s502 + $0x60] sm:%s492] %v527
                %v529 = vld [vmem:[%s501 + $0x68] sm:%s492]
                %530 = vst [vmem:[%s502 + $0x68] sm:%s492] %v529
                %v531 = vld [vmem:[%s501 + $0x70] sm:%s492]
                %532 = vst [vmem:[%s502 + $0x70] sm:%s492] %v531
                %v533 = vld [vmem:[%s501 + $0x78] sm:%s492]
                %534 = vst [vmem:[%s502 + $0x78] sm:%s492] %v533
                %s535 = sadd.s32 1, %s500
                %p536 = scmp.ge.s32.totalorder %s535, %s493
                %s537 = scalar_select %p536, 0, %s535
                %s538 = smul.u32 %s537, 128
                %s539 = smul.u32 %s537, 128
                %s540 = scalar_lea.vmem %s472, %s538 [#allocation2]
                %s541 = scalar_lea.vmem %s483, %s539
              $region53: #{tpu_custom_call.1} parent=47 // loop_footer
                %s497 = sadd.s32 %s495, 1
              $region54: #{tpu_custom_call.1} parent=47 // loop_footer_branch
                %494 = sbr.rel target = $region50
              $region55: #{tpu_custom_call.1} parent=47 // loop_exit
                _
              %s542 = sshrl.u32 %s479, 4
              %s543 = sand.u32 %s479, 15
              %s544 = smul.u32 %s542, 16
              %s545 = smul.u32 8, %s544
              %s546 = scalar_lea.vmem %s472, %s545 [#allocation2]
              %s547 = smul.u32 8, %s544
              %s548 = scalar_lea.vmem %s483, %s547
              // While loop
              $region56: #{tpu_custom_call.1} parent=47 // loop_pre_header
                _
              $region57: #{tpu_custom_call.1} parent=47 // loop_header
                %s550 = sphi 0, %s552
                %p551 = scmp.ge.s32.totalorder %s550, %s543
                %s555 = sphi 0, %s562
                %s556 = sphi %s546, %s565
                %s557 = sphi %s548, %s566
              $region58: #{tpu_custom_call.1} parent=47 // loop_header_branch
                %554 = sbr.rel (%p551) target = $region62
              $region59: #{tpu_custom_call.1} parent=47 // loop_body
                %v558 = vld [vmem:[%s556] sm:%s492]
                %559 = vst [vmem:[%s557] sm:%s492] %v558
                %s560 = sadd.s32 1, %s555
                %p561 = scmp.ge.s32.totalorder %s560, %s543
                %s562 = scalar_select %p561, 0, %s560
                %s563 = smul.u32 %s562, 8
                %s564 = smul.u32 %s562, 8
                %s565 = scalar_lea.vmem %s546, %s563 [#allocation2]
                %s566 = scalar_lea.vmem %s548, %s564
              $region60: #{tpu_custom_call.1} parent=47 // loop_footer
                %s552 = sadd.s32 %s550, 1
              $region61: #{tpu_custom_call.1} parent=47 // loop_footer_branch
                %549 = sbr.rel target = $region57
              $region62: #{tpu_custom_call.1} parent=47 // loop_exit
                _
            $region48: #{tpu_custom_call.1} parent=39 // pred_fallthru
              _
          $region40: #{tpu_custom_call.1} parent=35 // pred_fallthru
            _
          %645 = vnop
        $region36: #{tpu_custom_call.1} parent=31 // pred_fallthru
          _
      $region32: #{tpu_custom_call.1} parent=5 // pred_fallthru
        _
      %p646 = scmp.le.s32.totalorder 2, %s9
      // Predicated region
      $region85: #{tpu_custom_call.1} parent=5 // pred_check
        %p647 = pneg %p646
      $region86: #{tpu_custom_call.1} parent=5 // pred_check_branch
        %649 = sbr.rel (%p647) target = $region88
      $region87: #{tpu_custom_call.1} parent=5 // pred_region
        %s650 = ssub.s32 %s9, 2
        // Predicated region
        $region89: #{tpu_custom_call.1} parent=87 // pred_check
          %p651 = pneg %p116
        $region90: #{tpu_custom_call.1} parent=87 // pred_check_branch
          %653 = sbr.rel (%p651) target = $region92
        $region91: #{tpu_custom_call.1} parent=87 // pred_region
          %s654 = sand.u32 %s101, 1
          %s655 = sand.u32 %s101, 1
          %s656 = smul.addr %s655, 128
          %s657 = scalar_lea.vmem [#allocation2], %s656
        $region92: #{tpu_custom_call.1} parent=87 // pred_fallthru
          _
      $region88: #{tpu_custom_call.1} parent=5 // pred_fallthru
        _
    $region6: #{tpu_custom_call.1} parent=1 // loop_footer
      %s13 = sadd.s32 1, %s9
    $region7: #{tpu_custom_call.1} parent=1 // loop_footer_branch
      %8 = sbr.rel target = $region3
    $region8: #{tpu_custom_call.1} parent=1 // loop_exit
      _

</llo_original>
